<compile_context>
chip_gen: v7x
topology: tpu7x:2x2x1
jax: 0.10.0
libtpu: 0.0.40
codegen_flags: <defaults>
</compile_context>

<pallas_src>
import jax
import jax.numpy as jnp
from jax.experimental import pallas as pl
from jax.experimental.pallas import tpu as pltpu

_LANE = 128
_SUBLANE = 8
# Per-input, per-grid-step tile budget (bytes).  2 inputs x 2 pipeline buffers
# x 4 MiB = 16 MiB of input buffering: inside the 32 MiB scoped VMEM requested
# below on every generation (v5e/v6e/v7x).
_TILE_BYTES = 4 * 1024 * 1024
# Inner-loop chunk budget (elements, f32 after upcast): bounds the per-chunk
# temporaries (d, d*d, yt*yt) to ~1 MiB each.
_CHUNK_ELEMS = 256 * 1024
# Cap on batch rows packed per grid step (keeps chunk temporaries bounded when
# per-sample row counts are tiny).
_MAX_B_TILE = 256
_VMEM_LIMIT_BYTES = 32 * 1024 * 1024


def _cdiv(a, b):
    return -(-a // b)


def _round_down(a, b):
    return (a // b) * b


def _make_nmse_kernel(*, b_tile, s_tile, ch_s, grid_s_inner, s_rows, ragged_s):
    """Kernel over grid (batch blocks, reduction splits, row blocks)."""

    def nmse_kernel(yp_ref, yt_ref, num_ref, den_ref, num_acc, den_acc):
        isr = pl.program_id(2)  # innermost: per-sample reduction axis

        # New (batch block, split): reset the per-sample partial accumulators.
        @pl.when(isr == 0)
        def _():
            num_acc[...] = jnp.zeros_like(num_acc)
            den_acc[...] = jnp.zeros_like(den_acc)

        if ragged_s:
            # Absolute first row of this tile (for masking the ragged tail of
            # the last, partially-filled row block).
            s_blk = pl.program_id(1) * grid_s_inner + isr
            row0 = s_blk * s_tile

        # Short static chunk loop over the row axis of the tile: bounded f32
        # temporaries, direct accumulation into VMEM scratch (pure VPU adds).
        for start in range(0, s_tile, ch_s):
            rows = min(ch_s, s_tile - start)
            yp = yp_ref[:, start:start + rows, :].astype(jnp.float32)
            yt = yt_ref[:, start:start + rows, :].astype(jnp.float32)
            if ragged_s:
                # Rows >= S of a partial edge block hold unspecified data.
                ridx = row0 + start + jax.lax.broadcasted_iota(
                    jnp.int32, (b_tile, rows, _LANE), 1)
                valid = ridx < s_rows
                yp = jnp.where(valid, yp, 0.0)
                yt = jnp.where(valid, yt, 0.0)
            d = yp - yt
            num_acc[:, 0:rows, :] = num_acc[:, 0:rows, :] + d * d
            den_acc[:, 0:rows, :] = den_acc[:, 0:rows, :] + yt * yt

        # Last row block of this (batch block, split): one cross-sublane +
        # cross-lane collapse, then write lane-dense per-sample partials.
        @pl.when(isr == grid_s_inner - 1)
        def _():
            num2 = jnp.sum(num_acc[...], axis=1)                    # (b_tile, 128)
            den2 = jnp.sum(den_acc[...], axis=1)                    # (b_tile, 128)
            num_col = jnp.sum(num2, axis=-1, keepdims=True)         # (b_tile, 1)
            den_col = jnp.sum(den2, axis=-1, keepdims=True)         # (b_tile, 1)
            num_ref[...] = jnp.broadcast_to(num_col[None], (1, b_tile, _LANE))
            den_ref[...] = jnp.broadcast_to(den_col[None], (1, b_tile, _LANE))

    return nmse_kernel


def nmse_loss(y_pred, y_true, eps: float = 1e-12):
    """NMSE = mean_b( ||y_pred_b - y_true_b||^2 / (||y_true_b||^2 + eps) )."""
    assert y_pred.shape == y_true.shape
    B = y_pred.shape[0]
    L = 1
    for dim in y_pred.shape[1:]:
        L *= dim

    # Flatten per sample, keep native dtype through the DMA (bf16 stays bf16).
    yp = y_pred.reshape(B, L)
    yt = y_true.reshape(B, L)

    # Lane-dense (S, 128) rows per sample.  Pad ONLY to the next lane multiple
    # and ONLY when strictly needed (zero padding is exact for both sums).
    # S is never rounded up to a tile multiple -- ragged tails are masked
    # in-kernel instead of paying an extra HBM copy.
    S = _cdiv(L, _LANE)
    L_pad = S * _LANE
    if L_pad != L:
        yp = jnp.pad(yp, ((0, 0), (0, L_pad - L)))
        yt = jnp.pad(yt, ((0, 0), (0, L_pad - L)))
    yp = yp.reshape(B, S, _LANE)
    yt = yt.reshape(B, S, _LANE)

    itemsize = yp.dtype.itemsize
    tile_elems = max(_TILE_BYTES // itemsize, _SUBLANE * _LANE)

    # --- choose (b_tile, s_tile); b_tile is B or a multiple of 8, s_tile is S
    # or a multiple of 8 (Mosaic (8,128) block constraint; partial edge blocks
    # along either axis are handled without padding). ---
    if min(B, _SUBLANE) * S * _LANE <= tile_elems:
        # Whole samples fit in a tile: pack as many batch rows as allowed.
        s_tile = S
        b_fit = tile_elems // max(S * _LANE, 1)
        if B <= min(b_fit, _MAX_B_TILE):
            b_tile = B
        else:
            b_tile = max(_SUBLANE, _round_down(min(b_fit, _MAX_B_TILE), _SUBLANE))
    else:
        # A single sample exceeds the tile budget: tile its row axis.
        b_tile = B if B <= _SUBLANE else _SUBLANE
        s_tile = max(_SUBLANE,
                     _round_down(tile_elems // (b_tile * _LANE), _SUBLANE))

    grid_b = _cdiv(B, b_tile)
    grid_s_total = _cdiv(S, s_tile)
    ragged_s = (S % s_tile) != 0

    # v7x has 2 TensorCores: if the batch axis provides no parallel work,
    # split the per-sample reduction range across a second parallel grid axis
    # and combine the (num, den) partials in the wrapper.
    if grid_b == 1 and grid_s_total >= 2 and grid_s_total % 2 == 0:
        n_split = 2
    else:
        n_split = 1
    grid_s_inner = grid_s_total // n_split

    # Inner-loop chunk rows: bounds per-chunk f32 temporaries.
    ch_s = _round_down(_CHUNK_ELEMS // (b_tile * _LANE), _SUBLANE)
    ch_s = min(s_tile, max(_SUBLANE, ch_s))

    kernel = _make_nmse_kernel(b_tile=b_tile, s_tile=s_tile, ch_s=ch_s,
                               grid_s_inner=grid_s_inner, s_rows=S,
                               ragged_s=ragged_s)

    out_num, out_den = pl.pallas_call(
        kernel,
        out_shape=(
            jax.ShapeDtypeStruct((n_split, B, _LANE), jnp.float32),
            jax.ShapeDtypeStruct((n_split, B, _LANE), jnp.float32),
        ),
        grid_spec=pltpu.PrefetchScalarGridSpec(
            num_scalar_prefetch=0,
            grid=(grid_b, n_split, grid_s_inner),
            in_specs=[
                pl.BlockSpec((b_tile, s_tile, _LANE),
                             lambda ib, isp, isr: (ib, isp * grid_s_inner + isr, 0)),
                pl.BlockSpec((b_tile, s_tile, _LANE),
                             lambda ib, isp, isr: (ib, isp * grid_s_inner + isr, 0)),
            ],
            out_specs=[
                pl.BlockSpec((1, b_tile, _LANE), lambda ib, isp, isr: (isp, ib, 0)),
                pl.BlockSpec((1, b_tile, _LANE), lambda ib, isp, isr: (isp, ib, 0)),
            ],
            scratch_shapes=[
                pltpu.VMEM((b_tile, ch_s, _LANE), jnp.float32),  # num partials
                pltpu.VMEM((b_tile, ch_s, _LANE), jnp.float32),  # den partials
            ],
        ),
        compiler_params=pltpu.CompilerParams(
            dimension_semantics=("parallel", "parallel", "arbitrary"),
            vmem_limit_bytes=_VMEM_LIMIT_BYTES,
        ),
    )(yp, yt)

    # Combine split partials, add eps, divide and take the batch mean in the
    # wrapper (tiny (n_split, B) work; keeps every grid axis free of serial
    # cross-batch accumulation).
    num = jnp.sum(out_num[:, :, 0], axis=0)
    den = jnp.sum(out_den[:, :, 0], axis=0) + eps
    return jnp.mean(num / den)


def _nmse_ref(y_pred, y_true, eps=1e-12):
    yp = y_pred.astype(jnp.float32)
    yt = y_true.astype(jnp.float32)
    axes = tuple(range(1, y_pred.ndim))
    num = jnp.sum((yp - yt) ** 2, axis=axes)
    den = jnp.sum(yt ** 2, axis=axes) + eps
    return jnp.mean(num / den)


if __name__ == "__main__":
    key = jax.random.PRNGKey(0)
    k1, k2, k3, k4, k5, k6, k7, k8 = jax.random.split(key, 8)

    # 1) Module-shaped NCHW input (single-tile, batch-packed path).
    B, C, H, W = 2, 4, 16, 16
    y_pred = jax.random.normal(k1, (B, C, H, W), dtype=jnp.float32)
    y_true = jax.random.normal(k2, (B, C, H, W), dtype=jnp.float32)
    out = jax.block_until_ready(nmse_loss(y_pred, y_true))
    ref = _nmse_ref(y_pred, y_true)
    assert jnp.allclose(out, ref, rtol=1e-5, atol=1e-6), (out, ref)

    # 2) Non-lane-aligned shape (minimal lane padding only).
    yp2 = jax.random.normal(k3, (2, 3, 10, 10), dtype=jnp.float32)
    yt2 = jax.random.normal(k4, (2, 3, 10, 10), dtype=jnp.float32)
    out2 = jax.block_until_ready(nmse_loss(yp2, yt2))
    ref2 = _nmse_ref(yp2, yt2)
    assert jnp.allclose(out2, ref2, rtol=1e-5, atol=1e-6), (out2, ref2)

    # 3) bf16 inputs: native-dtype DMA, f32 accumulation in-kernel.
    yp3 = jax.random.normal(k5, (B, C, H, W), dtype=jnp.bfloat16)
    yt3 = jax.random.normal(k6, (B, C, H, W), dtype=jnp.bfloat16)
    out3 = jax.block_until_ready(nmse_loss(yp3, yt3))
    ref3 = _nmse_ref(yp3, yt3)
    assert jnp.allclose(out3, ref3, rtol=1e-4, atol=1e-5), (out3, ref3)

    # 4) Large per-sample size: exercises row tiling, the ragged-row in-kernel
    #    mask and the reduction split across the second parallel grid axis.
    yp4 = jax.random.normal(k7, (2, 3, 800, 320), dtype=jnp.float32)
    yt4 = jax.random.normal(k8, (2, 3, 800, 320), dtype=jnp.float32)
    out4 = jax.block_until_ready(nmse_loss(yp4, yt4))
    ref4 = _nmse_ref(yp4, yt4)
    assert jnp.allclose(out4, ref4, rtol=1e-4, atol=1e-6), (out4, ref4)

    print("KERNEL_OK")
</pallas_src>

<mosaic_0001>
module attributes {stable_mosaic.version = 11 : i64} {
  func.func @nmse_kernel(%arg0: i32, %arg1: i32, %arg2: i32, %arg3: memref<2x8x128xf32, #tpu.memory_space<vmem>>, %arg4: memref<2x8x128xf32, #tpu.memory_space<vmem>>, %arg5: memref<1x2x128xf32, #tpu.memory_space<vmem>>, %arg6: memref<1x2x128xf32, #tpu.memory_space<vmem>>, %arg7: memref<2x8x128xf32, #tpu.memory_space<vmem>>, %arg8: memref<2x8x128xf32, #tpu.memory_space<vmem>>) attributes {dimension_semantics = [#tpu.dimension_semantics<parallel>, #tpu.dimension_semantics<parallel>, #tpu.dimension_semantics<arbitrary>], iteration_bounds = array<i64: 1, 1, 1>, scalar_prefetch = 0 : i64, scratch_operands = 2 : i64, tpu.core_type = #tpu.core_type<tc>, window_params = [{transform_indices = @transform_0, window_bounds = array<i64: 2, 8, 128>}, {transform_indices = @transform_1, window_bounds = array<i64: 2, 8, 128>}, {transform_indices = @transform_2, window_bounds = array<i64: 1, 2, 128>}, {transform_indices = @transform_3, window_bounds = array<i64: 1, 2, 128>}]} {
    %c0_i32 = arith.constant 0 : i32
    %0 = arith.cmpi eq, %arg2, %c0_i32 : i32
    %1 = arith.extui %0 : i1 to i32
    %c0_i32_0 = arith.constant 0 : i32
    %2 = arith.cmpi ne, %1, %c0_i32_0 : i32
    scf.if %2 {
      %cst = arith.constant 0.000000e+00 : f32
      %17 = vector.broadcast %cst : f32 to vector<2x8x128xf32>
      %c0_20 = arith.constant 0 : index
      %c0_21 = arith.constant 0 : index
      %c0_22 = arith.constant 0 : index
      %18 = vector.load %arg7[%c0_20, %c0_21, %c0_22] : memref<2x8x128xf32, #tpu.memory_space<vmem>>, vector<2x8x128xf32>
      tpu.vector_store %arg7[%c0_20, %c0_21, %c0_22], %17 {strides = array<i32>} : memref<2x8x128xf32, #tpu.memory_space<vmem>>, vector<2x8x128xf32>,
      %cst_23 = arith.constant 0.000000e+00 : f32
      %19 = vector.broadcast %cst_23 : f32 to vector<2x8x128xf32>
      %c0_24 = arith.constant 0 : index
      %c0_25 = arith.constant 0 : index
      %c0_26 = arith.constant 0 : index
      %20 = vector.load %arg8[%c0_24, %c0_25, %c0_26] : memref<2x8x128xf32, #tpu.memory_space<vmem>>, vector<2x8x128xf32>
      tpu.vector_store %arg8[%c0_24, %c0_25, %c0_26], %19 {strides = array<i32>} : memref<2x8x128xf32, #tpu.memory_space<vmem>>, vector<2x8x128xf32>,
    } else {
    }
    %c0 = arith.constant 0 : index
    %c0_1 = arith.constant 0 : index
    %c0_2 = arith.constant 0 : index
    %3 = vector.load %arg3[%c0, %c0_1, %c0_2] : memref<2x8x128xf32, #tpu.memory_space<vmem>>, vector<2x8x128xf32>
    %c0_3 = arith.constant 0 : index
    %c0_4 = arith.constant 0 : index
    %c0_5 = arith.constant 0 : index
    %4 = vector.load %arg4[%c0_3, %c0_4, %c0_5] : memref<2x8x128xf32, #tpu.memory_space<vmem>>, vector<2x8x128xf32>
    %5 = arith.subf %3, %4 : vector<2x8x128xf32>
    %c0_6 = arith.constant 0 : index
    %c0_7 = arith.constant 0 : index
    %c0_8 = arith.constant 0 : index
    %6 = vector.load %arg7[%c0_6, %c0_7, %c0_8] : memref<2x8x128xf32, #tpu.memory_space<vmem>>, vector<2x8x128xf32>
    %7 = arith.mulf %5, %5 : vector<2x8x128xf32>
    %8 = arith.addf %6, %7 : vector<2x8x128xf32>
    %c0_9 = arith.constant 0 : index
    %c0_10 = arith.constant 0 : index
    %c0_11 = arith.constant 0 : index
    %9 = vector.load %arg7[%c0_9, %c0_10, %c0_11] : memref<2x8x128xf32, #tpu.memory_space<vmem>>, vector<2x8x128xf32>
    tpu.vector_store %arg7[%c0_9, %c0_10, %c0_11], %8 {strides = array<i32>} : memref<2x8x128xf32, #tpu.memory_space<vmem>>, vector<2x8x128xf32>,
    %c0_12 = arith.constant 0 : index
    %c0_13 = arith.constant 0 : index
    %c0_14 = arith.constant 0 : index
    %10 = vector.load %arg8[%c0_12, %c0_13, %c0_14] : memref<2x8x128xf32, #tpu.memory_space<vmem>>, vector<2x8x128xf32>
    %11 = arith.mulf %4, %4 : vector<2x8x128xf32>
    %12 = arith.addf %10, %11 : vector<2x8x128xf32>
    %c0_15 = arith.constant 0 : index
    %c0_16 = arith.constant 0 : index
    %c0_17 = arith.constant 0 : index
    %13 = vector.load %arg8[%c0_15, %c0_16, %c0_17] : memref<2x8x128xf32, #tpu.memory_space<vmem>>, vector<2x8x128xf32>
    tpu.vector_store %arg8[%c0_15, %c0_16, %c0_17], %12 {strides = array<i32>} : memref<2x8x128xf32, #tpu.memory_space<vmem>>, vector<2x8x128xf32>,
    %c0_i32_18 = arith.constant 0 : i32
    %14 = arith.cmpi eq, %arg2, %c0_i32_18 : i32
    %15 = arith.extui %14 : i1 to i32
    %c0_i32_19 = arith.constant 0 : i32
    %16 = arith.cmpi ne, %15, %c0_i32_19 : i32
    scf.if %16 {
      %c0_20 = arith.constant 0 : index
      %c0_21 = arith.constant 0 : index
      %c0_22 = arith.constant 0 : index
      %17 = vector.load %arg7[%c0_20, %c0_21, %c0_22] : memref<2x8x128xf32, #tpu.memory_space<vmem>>, vector<2x8x128xf32>
      %cst = arith.constant dense<0.000000e+00> : vector<2x128xf32>
      %18 = vector.multi_reduction <add>, %17, %cst [1] : vector<2x8x128xf32> to vector<2x128xf32>
      %c0_23 = arith.constant 0 : index
      %c0_24 = arith.constant 0 : index
      %c0_25 = arith.constant 0 : index
      %19 = vector.load %arg8[%c0_23, %c0_24, %c0_25] : memref<2x8x128xf32, #tpu.memory_space<vmem>>, vector<2x8x128xf32>
      %cst_26 = arith.constant dense<0.000000e+00> : vector<2x128xf32>
      %20 = vector.multi_reduction <add>, %19, %cst_26 [1] : vector<2x8x128xf32> to vector<2x128xf32>
      %cst_27 = arith.constant dense<0.000000e+00> : vector<2xf32>
      %21 = vector.multi_reduction <add>, %18, %cst_27 [1] : vector<2x128xf32> to vector<2xf32>
      %22 = vector.shape_cast %21 : vector<2xf32> to vector<2x1xf32>
      %cst_28 = arith.constant dense<0.000000e+00> : vector<2xf32>
      %23 = vector.multi_reduction <add>, %20, %cst_28 [1] : vector<2x128xf32> to vector<2xf32>
      %24 = vector.shape_cast %23 : vector<2xf32> to vector<2x1xf32>
      %25 = vector.shape_cast %22 : vector<2x1xf32> to vector<1x2x1xf32>
      %26 = vector.shape_cast %25 : vector<1x2x1xf32> to vector<1x2x1xf32>
      %27 = vector.broadcast %26 : vector<1x2x1xf32> to vector<1x2x128xf32>
      %c0_29 = arith.constant 0 : index
      %c0_30 = arith.constant 0 : index
      %c0_31 = arith.constant 0 : index
      %28 = vector.load %arg5[%c0_29, %c0_30, %c0_31] : memref<1x2x128xf32, #tpu.memory_space<vmem>>, vector<1x2x128xf32>
      tpu.vector_store %arg5[%c0_29, %c0_30, %c0_31], %27 {strides = array<i32>} : memref<1x2x128xf32, #tpu.memory_space<vmem>>, vector<1x2x128xf32>,
      %29 = vector.shape_cast %24 : vector<2x1xf32> to vector<1x2x1xf32>
      %30 = vector.shape_cast %29 : vector<1x2x1xf32> to vector<1x2x1xf32>
      %31 = vector.broadcast %30 : vector<1x2x1xf32> to vector<1x2x128xf32>
      %c0_32 = arith.constant 0 : index
      %c0_33 = arith.constant 0 : index
      %c0_34 = arith.constant 0 : index
      %32 = vector.load %arg6[%c0_32, %c0_33, %c0_34] : memref<1x2x128xf32, #tpu.memory_space<vmem>>, vector<1x2x128xf32>
      tpu.vector_store %arg6[%c0_32, %c0_33, %c0_34], %31 {strides = array<i32>} : memref<1x2x128xf32, #tpu.memory_space<vmem>>, vector<1x2x128xf32>,
    } else {
    }
    return
  }
  func.func @transform_0(%arg0: i32, %arg1: i32, %arg2: i32) -> (i32, i32, i32) {
    %c1_i32 = arith.constant 1 : i32
    %0 = arith.muli %arg1, %c1_i32 : i32
    %1 = arith.addi %0, %arg2 : i32
    %c0_i32 = arith.constant 0 : i32
    %c0_i32_0 = arith.constant 0 : i32
    return %arg0, %1, %c0_i32 : i32, i32, i32
  }
  func.func @transform_1(%arg0: i32, %arg1: i32, %arg2: i32) -> (i32, i32, i32) {
    %c1_i32 = arith.constant 1 : i32
    %0 = arith.muli %arg1, %c1_i32 : i32
    %1 = arith.addi %0, %arg2 : i32
    %c0_i32 = arith.constant 0 : i32
    %c0_i32_0 = arith.constant 0 : i32
    return %arg0, %1, %c0_i32 : i32, i32, i32
  }
  func.func @transform_2(%arg0: i32, %arg1: i32, %arg2: i32) -> (i32, i32, i32) {
    %c0_i32 = arith.constant 0 : i32
    %c0_i32_0 = arith.constant 0 : i32
    return %arg1, %arg0, %c0_i32 : i32, i32, i32
  }
  func.func @transform_3(%arg0: i32, %arg1: i32, %arg2: i32) -> (i32, i32, i32) {
    %c0_i32 = arith.constant 0 : i32
    %c0_i32_0 = arith.constant 0 : i32
    return %arg1, %arg0, %c0_i32 : i32, i32, i32
  }
}

</mosaic_0001>

<llo_original>
// kernel: tpu_custom_call.1
$region0: #{tpu_custom_call.1}
  #allocation0 [shape = 'u32[]', space=smem, size = 0x4, offset = 0x4, fixed_abs, tag = 'smem constant byte address 0x4 - core index']
  #allocation1 [shape = 'u32[144,128]{1,0:T(1,128)}', space=vmem, size = 0x12000, scoped, tag = 'internal scratch']
  #allocation2 [shape = 'f32[2,8,128]{2,1,0:T(8,128)}', space=vmem, size = 0x2000, scoped, tag = 'scratch operand']
  #allocation3 [shape = 'f32[2,8,128]{2,1,0:T(8,128)}', space=vmem, size = 0x2000, scoped, tag = 'scratch operand']
  %s0 = inlined_call_operand.hbm [shape: f32[2,8,128], index: 0, kind: input, shape index: {}]
  %s1 = inlined_call_operand.hbm [shape: f32[2,8,128], index: 1, kind: input, shape index: {}]
  %s2 = inlined_call_operand.hbm [shape: f32[1,2,128], index: 2, kind: output, shape index: {0}]
  %s3 = inlined_call_operand.hbm [shape: f32[1,2,128], index: 3, kind: output, shape index: {1}]
  %4 = xla_tuple %s2, %s3
  %s5 = sld [smem:[#allocation0]]
  $region42: #{tpu_custom_call.1} parent=0
    _
  %s7 = ssub.s32 1, %s5
  %s8 = scalar_select 0, %s7, %s5
  $region1: #{tpu_custom_call.1} parent=0
    #allocation4 [shape = 'u8[8192]{0}', space=vmem, size = 0x2000, scoped, tag = 'input window, operand 0, single buffered']
    #allocation5 [shape = 's32[1]{0}', space=sflag, size = 0x4, scoped, tag = 'scoped memory for tpu_custom_call.1']
    #allocation6 [shape = 's32[1]{0}', space=sflag, size = 0x4, scoped, tag = 'scoped memory for tpu_custom_call.1']
    #allocation7 [shape = 'u8[8192]{0}', space=vmem, size = 0x2000, scoped, tag = 'input window, operand 1, single buffered']
    #allocation8 [shape = 's32[1]{0}', space=sflag, size = 0x4, scoped, tag = 'scoped memory for tpu_custom_call.1']
    #allocation9 [shape = 'u8[1024]{0}', space=vmem, size = 0x400, scoped, tag = 'output window, operand 0, single buffered']
    #allocation10 [shape = 'u8[1024]{0}', space=vmem, size = 0x400, scoped, tag = 'output window, operand 1, single buffered']
    #allocation11 [shape = 's32[1]{0}', space=sflag, size = 0x4, scoped, tag = 'scoped memory for tpu_custom_call.1']
    %9 = vsyncpa [#allocation5], 0
    %10 = vsyncpa [#allocation8], 0
    %11 = vsyncpa [#allocation6], 0
    %12 = vsyncpa [#allocation11], 0
    // Predicated region
    $region2: #{tpu_custom_call.1} parent=1 // pred_check
      _
    $region3: #{tpu_custom_call.1} parent=1 // pred_check_branch
      %14 = sbr.rel (0) target = $region5
    $region4: #{tpu_custom_call.1} parent=1 // pred_region
      %s15 = sadd.s32 0, 0
      %s17 = ssub.s32 256, 256
      %18 = vsyncadd [#allocation5], %s17
      %s19 = smul.addr %s15, 128
      %s20 = scalar_lea.hbm %s0, %s19
      %s21 = sshll.u32 [#allocation4], 4
      %s22 = int_to_ptr.vmem [resolvable:$true] %s21
      %27 = dma.hbm_to_vmem [thread:$0]  %s20, 256, %s22, [#allocation5], 128, 128, 8
    $region5: #{tpu_custom_call.1} parent=1 // pred_fallthru
      _
    // Predicated region
    $region6: #{tpu_custom_call.1} parent=1 // pred_check
      _
    $region7: #{tpu_custom_call.1} parent=1 // pred_check_branch
      %29 = sbr.rel (0) target = $region9
    $region8: #{tpu_custom_call.1} parent=1 // pred_region
      %s30 = sadd.s32 0, 0
      %s32 = ssub.s32 256, 256
      %33 = vsyncadd [#allocation8], %s32
      %s34 = smul.addr %s30, 128
      %s35 = scalar_lea.hbm %s1, %s34
      %s36 = sshll.u32 [#allocation7], 4
      %s37 = int_to_ptr.vmem [resolvable:$true] %s36
      %42 = dma.hbm_to_vmem [thread:$0]  %s35, 256, %s37, [#allocation8], 128, 128, 8
    $region9: #{tpu_custom_call.1} parent=1 // pred_fallthru
      _
    // Predicated region
    $region10: #{tpu_custom_call.1} parent=1 // pred_check
      _
    $region11: #{tpu_custom_call.1} parent=1 // pred_check_branch
      %44 = sbr.rel (0) target = $region13
    $region12: #{tpu_custom_call.1} parent=1 // pred_region
      %45 = dma.done [#allocation5], 256
    $region13: #{tpu_custom_call.1} parent=1 // pred_fallthru
      _
    // Predicated region
    $region14: #{tpu_custom_call.1} parent=1 // pred_check
      _
    $region15: #{tpu_custom_call.1} parent=1 // pred_check_branch
      %47 = sbr.rel (0) target = $region17
    $region16: #{tpu_custom_call.1} parent=1 // pred_region
      %48 = dma.done [#allocation8], 256
    $region17: #{tpu_custom_call.1} parent=1 // pred_fallthru
      _
    %s49 = sadd.s32 0, 0
    %s50 = sadd.s32 0, 0
    %p51 = scmp.eq.s32.totalorder 0, 0
    // Predicated region
    $region18: #{tpu_custom_call.1} parent=1 // pred_check
      %p52 = pneg %p51
    $region19: #{tpu_custom_call.1} parent=1 // pred_check_branch
      %54 = sbr.rel (%p52) target = $region21
    $region20: #{tpu_custom_call.1} parent=1 // pred_region
      %55 = vst [vmem:[#allocation2] sm:$0xff] 0.0
      %56 = vst [vmem:[#allocation2 + $0x8] sm:$0xff] 0.0
      %57 = vst [vmem:[#allocation3] sm:$0xff] 0.0
      %58 = vst [vmem:[#allocation3 + $0x8] sm:$0xff] 0.0
    $region21: #{tpu_custom_call.1} parent=1 // pred_fallthru
      _
    %v59 = vld [vmem:[#allocation4] sm:$0xff]
    %v60 = vld [vmem:[#allocation4 + $0x8] sm:$0xff]
    %v61 = vld [vmem:[#allocation7] sm:$0xff]
    %v62 = vld [vmem:[#allocation7 + $0x8] sm:$0xff]
    %v63 = vsub.f32 %v59, %v61
    %v64 = vsub.f32 %v60, %v62
    %v65 = vld [vmem:[#allocation2] sm:$0xff]
    %v66 = vld [vmem:[#allocation2 + $0x8] sm:$0xff]
    %v67 = vmul.f32 %v63, %v63
    %v68 = vmul.f32 %v64, %v64
    %v69 = vadd.f32 %v65, %v67
    %v70 = vadd.f32 %v66, %v68
    %71 = vst [vmem:[#allocation2] sm:$0xff] %v69
    %72 = vst [vmem:[#allocation2 + $0x8] sm:$0xff] %v70
    %v73 = vld [vmem:[#allocation3] sm:$0xff]
    %v74 = vld [vmem:[#allocation3 + $0x8] sm:$0xff]
    %v75 = vmul.f32 %v61, %v61
    %v76 = vmul.f32 %v62, %v62
    %v77 = vadd.f32 %v73, %v75
    %v78 = vadd.f32 %v74, %v76
    %79 = vst [vmem:[#allocation3] sm:$0xff] %v77
    %80 = vst [vmem:[#allocation3 + $0x8] sm:$0xff] %v78
    // Predicated region
    $region22: #{tpu_custom_call.1} parent=1 // pred_check
      %p81 = pneg %p51
    $region23: #{tpu_custom_call.1} parent=1 // pred_check_branch
      %83 = sbr.rel (%p81) target = $region25
    $region24: #{tpu_custom_call.1} parent=1 // pred_region
      %v84 = vld [vmem:[#allocation2] sm:$0xff]
      %v85 = vld [vmem:[#allocation2 + $0x8] sm:$0xff]
      %v86 = vrot.slane %v84, 4
      %v87 = vadd.f32 %v84, %v86
      %v88 = vrot.slane %v87, 2
      %v89 = vadd.f32 %v87, %v88
      %v90 = vrot.slane %v89, 1
      %v91 = vadd.f32 %v89, %v90
      %v92 = vrot.slane %v85, 4
      %v93 = vadd.f32 %v85, %v92
      %v94 = vrot.slane %v93, 2
      %v95 = vadd.f32 %v93, %v94
      %v96 = vrot.slane %v95, 1
      %v97 = vadd.f32 %v95, %v96
      %v98 = vld [vmem:[#allocation3] sm:$0xff]
      %v99 = vld [vmem:[#allocation3 + $0x8] sm:$0xff]
      %v100 = vrot.slane %v98, 4
      %v101 = vadd.f32 %v98, %v100
      %v102 = vrot.slane %v101, 2
      %v103 = vadd.f32 %v101, %v102
      %v104 = vrot.slane %v103, 1
      %v105 = vadd.f32 %v103, %v104
      %v106 = vrot.slane %v99, 4
      %v107 = vadd.f32 %v99, %v106
      %v108 = vrot.slane %v107, 2
      %v109 = vadd.f32 %v107, %v108
      %v110 = vrot.slane %v109, 1
      %v111 = vadd.f32 %v109, %v110
      %vm114 = vcmask 1041409
      %v115 = vsel %vm114, %v97, %v91
      %vm117 = vcmask 1041408
      %v118 = vsel %vm117, %v115, 0.0
      %119 = vadd.xlane.f32.xlu0 %v118
      %v120 = vpop.xlane.xlu0 %119
      %v123 = vsel %vm114, %v111, %v105
      %v125 = vsel %vm117, %v123, 0.0
      %126 = vadd.xlane.f32.xlu0 %v125
      %v127 = vpop.xlane.xlu0 %126
      %128 = vst [vmem:[#allocation9] sm:$0x3] %v120
      %129 = vst [vmem:[#allocation10] sm:$0x3] %v127
    $region25: #{tpu_custom_call.1} parent=1 // pred_fallthru
      _
    // Predicated region
    $region26: #{tpu_custom_call.1} parent=1 // pred_check
      _
    $region27: #{tpu_custom_call.1} parent=1 // pred_check_branch
      %131 = sbr.rel (0) target = $region29
    $region28: #{tpu_custom_call.1} parent=1 // pred_region
      %s133 = ssub.s32 32, 32
      %134 = vsyncadd [#allocation6], %s133
      %s136 = sshll.u32 [#allocation9], 4
      %s137 = int_to_ptr.vmem [resolvable:$true] %s136
      %139 = dma.vmem_to_hbm [thread:$0]  %s137, 32, %s2, [#allocation6]
    $region29: #{tpu_custom_call.1} parent=1 // pred_fallthru
      _
    // Predicated region
    $region30: #{tpu_custom_call.1} parent=1 // pred_check
      _
    $region31: #{tpu_custom_call.1} parent=1 // pred_check_branch
      %141 = sbr.rel (0) target = $region33
    $region32: #{tpu_custom_call.1} parent=1 // pred_region
      %s143 = ssub.s32 32, 32
      %144 = vsyncadd [#allocation11], %s143
      %s146 = sshll.u32 [#allocation10], 4
      %s147 = int_to_ptr.vmem [resolvable:$true] %s146
      %149 = dma.vmem_to_hbm [thread:$0]  %s147, 32, %s3, [#allocation11]
    $region33: #{tpu_custom_call.1} parent=1 // pred_fallthru
      _
    // Predicated region
    $region34: #{tpu_custom_call.1} parent=1 // pred_check
      _
    $region35: #{tpu_custom_call.1} parent=1 // pred_check_branch
      %151 = sbr.rel (0) target = $region37
    $region36: #{tpu_custom_call.1} parent=1 // pred_region
      %152 = dma.done [#allocation6], 32
    $region37: #{tpu_custom_call.1} parent=1 // pred_fallthru
      _
    // Predicated region
    $region38: #{tpu_custom_call.1} parent=1 // pred_check
      _
    $region39: #{tpu_custom_call.1} parent=1 // pred_check_branch
      %154 = sbr.rel (0) target = $region41
    $region40: #{tpu_custom_call.1} parent=1 // pred_region
      %155 = dma.done [#allocation11], 32
    $region41: #{tpu_custom_call.1} parent=1 // pred_fallthru
      _
    %156 = vsyncpa [#allocation5], 1
    %157 = vsyncpa [#allocation8], 1
    %158 = vsyncpa [#allocation6], 1
    %159 = vsyncpa [#allocation11], 1

</llo_original>
